<compile_context>
chip_gen: v6e
topology: v6e:2x2x1
jax: 0.10.0
libtpu: 0.0.40
codegen_flags: <defaults>
</compile_context>

<pallas_src>
import jax
import jax.numpy as jnp
from jax.experimental import pallas as pl
from jax.experimental.pallas import tpu as pltpu

LANE = 128
SUBLANE = 8


def _round_up(n, m):
    return ((n + m - 1) // m) * m


def _cdiv(a, b):
    return -(-a // b)


def mlp_kernel(x_ref, w1_ref, b1_ref, w2_ref, b2_ref, w3_ref, b3_ref, o_ref):
    # x_ref: (TB, in_f) f32 ; w1: (in_f, 128) bf16 ; w2: (128, 128) bf16 ;
    # w3: (128, out_f) bf16 ; biases f32 ; o_ref: (TB, out_f) f32
    x = x_ref[...].astype(jnp.bfloat16)

    # Hoist bias loads above the matmul chain (loaded once per grid step).
    b1 = b1_ref[...]
    b2 = b2_ref[...]
    b3 = b3_ref[...]

    h1 = jnp.dot(x, w1_ref[...], preferred_element_type=jnp.float32) + b1
    h1 = jnp.maximum(h1, 0.0).astype(jnp.bfloat16)

    h2 = jnp.dot(h1, w2_ref[...], preferred_element_type=jnp.float32) + b2
    h2 = jnp.maximum(h2, 0.0).astype(jnp.bfloat16)

    out = jnp.dot(h2, w3_ref[...], preferred_element_type=jnp.float32) + b3
    o_ref[...] = out.astype(o_ref.dtype)


def mlp_forward(x, packed_params, dims, *, block_b=2048):
    """x: (B, in_f) f32.  packed_params from pack_params().  dims = true
    (in_f, h1, h2, out_f)."""
    w1, b1, w2, b2, w3, b3 = packed_params
    in_f, h1_f, h2_f, out_f = dims
    B = x.shape[0]
    assert x.shape[1] == in_f == w1.shape[0]
    assert w3.shape[1] == out_f

    # Batch tile: multiple of 8 sublanes, large enough to amortize per-step
    # overhead, but capped at ceil(B/2) so v7x megacore gets >= 2 grid steps.
    TB = min(block_b, _round_up(B, SUBLANE))
    if B > 2 * SUBLANE:
        TB = min(TB, _round_up(_cdiv(B, 2), SUBLANE))
    grid = (_cdiv(B, TB),)

    # Weights/biases: constant block index across the batch grid -> VMEM-resident.
    def resident(arr):
        return pl.BlockSpec(arr.shape, lambda i: (0, 0))

    # Cost estimate from TRUE (unpadded) dims so XLA schedules around the call
    # correctly.
    flops = 2 * B * (in_f * h1_f + h1_f * h2_f + h2_f * out_f)
    bytes_accessed = (
        B * in_f * 4                                   # x (f32)
        + 2 * (in_f * h1_f + h1_f * h2_f + h2_f * out_f)  # bf16 weights
        + 4 * (h1_f + h2_f + out_f)                    # f32 biases
        + B * out_f * 4                                # output (f32)
    )
    cost = pl.CostEstimate(flops=flops, transcendentals=0,
                           bytes_accessed=bytes_accessed)

    out = pl.pallas_call(
        mlp_kernel,
        out_shape=jax.ShapeDtypeStruct((B, out_f), jnp.float32),
        grid_spec=pltpu.PrefetchScalarGridSpec(
            num_scalar_prefetch=0,
            grid=grid,
            in_specs=[
                pl.BlockSpec((TB, in_f), lambda i: (i, 0)),  # full last dim (=7)
                resident(w1), resident(b1),
                resident(w2), resident(b2),
                resident(w3), resident(b3),
            ],
            out_specs=pl.BlockSpec((TB, out_f), lambda i: (i, 0)),  # full last dim
        ),
        compiler_params=pltpu.CompilerParams(
            dimension_semantics=("parallel",),
        ),
        cost_estimate=cost,
    )(x, w1, b1, w2, b2, w3, b3)

    return out


def init_params(key, in_features=7, h1=16, h2=16, out_features=22):
    """PyTorch nn.Linear-style init; weights stored as [in, out] (transposed vs torch)."""
    def linear(k, fan_in, fan_out):
        kw, kb = jax.random.split(k)
        bound = 1.0 / jnp.sqrt(fan_in)
        w = jax.random.uniform(kw, (fan_in, fan_out), jnp.float32, -bound, bound)
        b = jax.random.uniform(kb, (fan_out,), jnp.float32, -bound, bound)
        return w, b

    k1, k2, k3 = jax.random.split(key, 3)
    w1, b1 = linear(k1, in_features, h1)
    w2, b2 = linear(k2, h1, h2)
    w3, b3 = linear(k3, h2, out_features)
    return (w1, b1, w2, b2, w3, b3)


def pack_params(params):
    """Pad ONLY the hidden feature dims up to 128 lanes (zero padding keeps the
    math exact: padded h1/h2 columns are ReLU(0)=0).  The true input dim (7)
    and output dim (22) are kept as-is so no HBM bytes are wasted on them.
    Weights are cast to bf16 for the MXU; biases stay f32, shaped (1, out)."""
    w1, b1, w2, b2, w3, b3 = params
    in_f, h1 = w1.shape
    _, h2 = w2.shape
    _, out_f = w3.shape
    h1p = _round_up(h1, LANE)
    h2p = _round_up(h2, LANE)

    w1p = jnp.zeros((in_f, h1p), jnp.float32).at[:, :h1].set(w1).astype(jnp.bfloat16)
    b1p = jnp.zeros((1, h1p), jnp.float32).at[0, :h1].set(b1)

    w2p = jnp.zeros((h1p, h2p), jnp.float32).at[:h1, :h2].set(w2).astype(jnp.bfloat16)
    b2p = jnp.zeros((1, h2p), jnp.float32).at[0, :h2].set(b2)

    w3p = jnp.zeros((h2p, out_f), jnp.float32).at[:h2, :].set(w3).astype(jnp.bfloat16)
    b3p = b3.reshape(1, out_f).astype(jnp.float32)

    dims = (in_f, h1, h2, out_f)
    return (w1p, b1p, w2p, b2p, w3p, b3p), dims


def mlp_reference(x, params):
    w1, b1, w2, b2, w3, b3 = params
    h1 = jnp.maximum(x @ w1 + b1, 0.0)
    h2 = jnp.maximum(h1 @ w2 + b2, 0.0)
    return h2 @ w3 + b3


if __name__ == "__main__":
    key = jax.random.PRNGKey(0)
    k_param, k_x, k_x2 = jax.random.split(key, 3)

    in_features, h1, h2, out_features = 7, 16, 16, 22
    params = init_params(k_param, in_features, h1, h2, out_features)
    packed, dims = pack_params(params)

    # Small primary check (B=8: single grid step).
    B = 8
    x = jax.random.normal(k_x, (B, in_features), jnp.float32)
    out = jax.block_until_ready(mlp_forward(x, packed, dims))
    ref = mlp_reference(x, params)  # pure f32 reference (PyTorch semantics)
    assert out.shape == (B, out_features), out.shape
    # bf16 weights/activations on the MXU with f32 accumulation -> loose tolerance.
    max_err = float(jnp.max(jnp.abs(out - ref)))
    assert jnp.allclose(out, ref, atol=5e-2, rtol=5e-2), f"mismatch, max abs err={max_err}"

    # Secondary check: non-divisible batch -> 2 grid steps with a masked boundary block.
    B2 = 100
    x2 = jax.random.normal(k_x2, (B2, in_features), jnp.float32)
    out2 = jax.block_until_ready(mlp_forward(x2, packed, dims))
    ref2 = mlp_reference(x2, params)
    assert out2.shape == (B2, out_features), out2.shape
    max_err2 = float(jnp.max(jnp.abs(out2 - ref2)))
    assert jnp.allclose(out2, ref2, atol=5e-2, rtol=5e-2), f"mismatch, max abs err={max_err2}"

    print("KERNEL_OK")
</pallas_src>

<mosaic_0001>
module attributes {stable_mosaic.version = 11 : i64} {
  func.func @mlp_kernel(%arg0: i32, %arg1: memref<8x7xf32, #tpu.memory_space<vmem>>, %arg2: memref<7x128xbf16, #tpu.memory_space<vmem>>, %arg3: memref<1x128xf32, #tpu.memory_space<vmem>>, %arg4: memref<128x128xbf16, #tpu.memory_space<vmem>>, %arg5: memref<1x128xf32, #tpu.memory_space<vmem>>, %arg6: memref<128x22xbf16, #tpu.memory_space<vmem>>, %arg7: memref<1x22xf32, #tpu.memory_space<vmem>>, %arg8: memref<8x22xf32, #tpu.memory_space<vmem>>) attributes {dimension_semantics = [#tpu.dimension_semantics<parallel>], iteration_bounds = array<i64: 1>, scalar_prefetch = 0 : i64, scratch_operands = 0 : i64, tpu.core_type = #tpu.core_type<tc>, window_params = [{transform_indices = @transform_0, window_bounds = array<i64: 8, 7>}, {pipeline_mode = #tpu.pipeline_mode<synchronous>, transform_indices = @transform_1, window_bounds = array<i64: 7, 128>}, {pipeline_mode = #tpu.pipeline_mode<synchronous>, transform_indices = @transform_2, window_bounds = array<i64: 1, 128>}, {pipeline_mode = #tpu.pipeline_mode<synchronous>, transform_indices = @transform_3, window_bounds = array<i64: 128, 128>}, {pipeline_mode = #tpu.pipeline_mode<synchronous>, transform_indices = @transform_4, window_bounds = array<i64: 1, 128>}, {pipeline_mode = #tpu.pipeline_mode<synchronous>, transform_indices = @transform_5, window_bounds = array<i64: 128, 22>}, {pipeline_mode = #tpu.pipeline_mode<synchronous>, transform_indices = @transform_6, window_bounds = array<i64: 1, 22>}, {transform_indices = @transform_7, window_bounds = array<i64: 8, 22>}]} {
    %c0 = arith.constant 0 : index
    %c0_0 = arith.constant 0 : index
    %0 = vector.load %arg1[%c0, %c0_0] : memref<8x7xf32, #tpu.memory_space<vmem>>, vector<8x7xf32>
    %1 = arith.truncf %0 : vector<8x7xf32> to vector<8x7xbf16>
    %c0_1 = arith.constant 0 : index
    %c0_2 = arith.constant 0 : index
    %2 = vector.load %arg3[%c0_1, %c0_2] : memref<1x128xf32, #tpu.memory_space<vmem>>, vector<1x128xf32>
    %c0_3 = arith.constant 0 : index
    %c0_4 = arith.constant 0 : index
    %3 = vector.load %arg5[%c0_3, %c0_4] : memref<1x128xf32, #tpu.memory_space<vmem>>, vector<1x128xf32>
    %c0_5 = arith.constant 0 : index
    %c0_6 = arith.constant 0 : index
    %4 = vector.load %arg7[%c0_5, %c0_6] : memref<1x22xf32, #tpu.memory_space<vmem>>, vector<1x22xf32>
    %c0_7 = arith.constant 0 : index
    %c0_8 = arith.constant 0 : index
    %5 = vector.load %arg2[%c0_7, %c0_8] : memref<7x128xbf16, #tpu.memory_space<vmem>>, vector<7x128xbf16>
    %cst = arith.constant dense<0.000000e+00> : vector<8x128xf32>
    %6 = tpu.matmul %1, %5, %cst {dimension_numbers = #tpu.dot_dimension_numbers<[1], [0], [0], [1], [0, 0, 1, 1], [], []>} : vector<8x7xbf16>, vector<7x128xbf16>, vector<8x128xf32> -> vector<8x128xf32>
    %7 = vector.broadcast %2 : vector<1x128xf32> to vector<8x128xf32>
    %8 = arith.addf %6, %7 : vector<8x128xf32>
    %cst_9 = arith.constant 0.000000e+00 : f32
    %9 = vector.broadcast %cst_9 : f32 to vector<8x128xf32>
    %10 = arith.maximumf %8, %9 : vector<8x128xf32>
    %11 = arith.truncf %10 : vector<8x128xf32> to vector<8x128xbf16>
    %c0_10 = arith.constant 0 : index
    %c0_11 = arith.constant 0 : index
    %12 = vector.load %arg4[%c0_10, %c0_11] : memref<128x128xbf16, #tpu.memory_space<vmem>>, vector<128x128xbf16>
    %cst_12 = arith.constant dense<0.000000e+00> : vector<8x128xf32>
    %13 = tpu.matmul %11, %12, %cst_12 {dimension_numbers = #tpu.dot_dimension_numbers<[1], [0], [0], [1], [0, 0, 1, 1], [], []>} : vector<8x128xbf16>, vector<128x128xbf16>, vector<8x128xf32> -> vector<8x128xf32>
    %14 = vector.broadcast %3 : vector<1x128xf32> to vector<8x128xf32>
    %15 = arith.addf %13, %14 : vector<8x128xf32>
    %cst_13 = arith.constant 0.000000e+00 : f32
    %16 = vector.broadcast %cst_13 : f32 to vector<8x128xf32>
    %17 = arith.maximumf %15, %16 : vector<8x128xf32>
    %18 = arith.truncf %17 : vector<8x128xf32> to vector<8x128xbf16>
    %c0_14 = arith.constant 0 : index
    %c0_15 = arith.constant 0 : index
    %19 = vector.load %arg6[%c0_14, %c0_15] : memref<128x22xbf16, #tpu.memory_space<vmem>>, vector<128x22xbf16>
    %cst_16 = arith.constant dense<0.000000e+00> : vector<8x22xf32>
    %20 = tpu.matmul %18, %19, %cst_16 {dimension_numbers = #tpu.dot_dimension_numbers<[1], [0], [0], [1], [0, 0, 1, 1], [], []>} : vector<8x128xbf16>, vector<128x22xbf16>, vector<8x22xf32> -> vector<8x22xf32>
    %21 = vector.broadcast %4 : vector<1x22xf32> to vector<8x22xf32>
    %22 = arith.addf %20, %21 : vector<8x22xf32>
    %c0_17 = arith.constant 0 : index
    %c0_18 = arith.constant 0 : index
    %23 = vector.load %arg8[%c0_17, %c0_18] : memref<8x22xf32, #tpu.memory_space<vmem>>, vector<8x22xf32>
    tpu.vector_store %arg8[%c0_17, %c0_18], %22 {strides = array<i32>} : memref<8x22xf32, #tpu.memory_space<vmem>>, vector<8x22xf32>,
    return
  }
  func.func @transform_0(%arg0: i32) -> (i32, i32) {
    %c0_i32 = arith.constant 0 : i32
    %c0_i32_0 = arith.constant 0 : i32
    return %arg0, %c0_i32 : i32, i32
  }
  func.func @transform_1(%arg0: i32) -> (i32, i32) {
    %c0_i32 = arith.constant 0 : i32
    %c0_i32_0 = arith.constant 0 : i32
    %c0_i32_1 = arith.constant 0 : i32
    return %c0_i32, %c0_i32_0 : i32, i32
  }
  func.func @transform_2(%arg0: i32) -> (i32, i32) {
    %c0_i32 = arith.constant 0 : i32
    %c0_i32_0 = arith.constant 0 : i32
    %c0_i32_1 = arith.constant 0 : i32
    return %c0_i32, %c0_i32_0 : i32, i32
  }
  func.func @transform_3(%arg0: i32) -> (i32, i32) {
    %c0_i32 = arith.constant 0 : i32
    %c0_i32_0 = arith.constant 0 : i32
    %c0_i32_1 = arith.constant 0 : i32
    return %c0_i32, %c0_i32_0 : i32, i32
  }
  func.func @transform_4(%arg0: i32) -> (i32, i32) {
    %c0_i32 = arith.constant 0 : i32
    %c0_i32_0 = arith.constant 0 : i32
    %c0_i32_1 = arith.constant 0 : i32
    return %c0_i32, %c0_i32_0 : i32, i32
  }
  func.func @transform_5(%arg0: i32) -> (i32, i32) {
    %c0_i32 = arith.constant 0 : i32
    %c0_i32_0 = arith.constant 0 : i32
    %c0_i32_1 = arith.constant 0 : i32
    return %c0_i32, %c0_i32_0 : i32, i32
  }
  func.func @transform_6(%arg0: i32) -> (i32, i32) {
    %c0_i32 = arith.constant 0 : i32
    %c0_i32_0 = arith.constant 0 : i32
    %c0_i32_1 = arith.constant 0 : i32
    return %c0_i32, %c0_i32_0 : i32, i32
  }
  func.func @transform_7(%arg0: i32) -> (i32, i32) {
    %c0_i32 = arith.constant 0 : i32
    %c0_i32_0 = arith.constant 0 : i32
    return %arg0, %c0_i32 : i32, i32
  }
}

</mosaic_0001>

<llo_original>
// kernel: tpu_custom_call.1
$region0: #{tpu_custom_call.1}
  #allocation0 [shape = 'u32[]', space=smem, size = 0x4, offset = 0x4, fixed_abs, tag = 'smem constant byte address 0x4 - core index']
  #allocation1 [shape = 'u32[144,128]{1,0:T(1,128)}', space=vmem, size = 0x12000, scoped, tag = 'internal scratch']
  %s0 = inlined_call_operand.vmem [shape: f32[8,7], index: 0, kind: input, shape index: {}]
  %s1 = inlined_call_operand.vmem [shape: bf16[7,128], index: 1, kind: input, shape index: {}]
  %s2 = inlined_call_operand.vmem [shape: f32[1,128], index: 2, kind: input, shape index: {}]
  %s3 = inlined_call_operand.vmem [shape: bf16[128,128], index: 3, kind: input, shape index: {}]
  %s4 = inlined_call_operand.vmem [shape: f32[1,128], index: 4, kind: input, shape index: {}]
  %s5 = inlined_call_operand.vmem [shape: bf16[128,22], index: 5, kind: input, shape index: {}]
  %s6 = inlined_call_operand.vmem [shape: f32[1,22], index: 6, kind: input, shape index: {}]
  %s7 = inlined_call_operand.hbm [shape: f32[8,22], index: 7, kind: output, shape index: {}]
  %s8 = sld [smem:[#allocation0]]
  $region38: #{tpu_custom_call.1} parent=0
    _
  %s10 = ssub.s32 1, %s8
  %s11 = scalar_select 0, %s10, %s8
  $region1: #{tpu_custom_call.1} parent=0
    #allocation2 [shape = 'u8[4096]{0}', space=vmem, size = 0x1000, scoped, tag = 'output window, operand 0, single buffered']
    #allocation3 [shape = 's32[1]{0}', space=sflag, size = 0x4, scoped, tag = 'scoped memory for tpu_custom_call.1']
    %12 = vsyncpa [#allocation3], 0
    // Predicated region
    $region2: #{tpu_custom_call.1} parent=1 // pred_check
      _
    $region3: #{tpu_custom_call.1} parent=1 // pred_check_branch
      %14 = sbr.rel (0) target = $region5
    $region4: #{tpu_custom_call.1} parent=1 // pred_region
      _
    $region5: #{tpu_custom_call.1} parent=1 // pred_fallthru
      _
    // Predicated region
    $region6: #{tpu_custom_call.1} parent=1 // pred_check
      _
    $region7: #{tpu_custom_call.1} parent=1 // pred_check_branch
      %16 = sbr.rel (0) target = $region9
    $region8: #{tpu_custom_call.1} parent=1 // pred_region
      _
    $region9: #{tpu_custom_call.1} parent=1 // pred_fallthru
      _
    // Predicated region
    $region10: #{tpu_custom_call.1} parent=1 // pred_check
      _
    $region11: #{tpu_custom_call.1} parent=1 // pred_check_branch
      %18 = sbr.rel (0) target = $region13
    $region12: #{tpu_custom_call.1} parent=1 // pred_region
      _
    $region13: #{tpu_custom_call.1} parent=1 // pred_fallthru
      _
    // Predicated region
    $region14: #{tpu_custom_call.1} parent=1 // pred_check
      _
    $region15: #{tpu_custom_call.1} parent=1 // pred_check_branch
      %20 = sbr.rel (0) target = $region17
    $region16: #{tpu_custom_call.1} parent=1 // pred_region
      _
    $region17: #{tpu_custom_call.1} parent=1 // pred_fallthru
      _
    // Predicated region
    $region18: #{tpu_custom_call.1} parent=1 // pred_check
      _
    $region19: #{tpu_custom_call.1} parent=1 // pred_check_branch
      %22 = sbr.rel (0) target = $region21
    $region20: #{tpu_custom_call.1} parent=1 // pred_region
      _
    $region21: #{tpu_custom_call.1} parent=1 // pred_fallthru
      _
    // Predicated region
    $region22: #{tpu_custom_call.1} parent=1 // pred_check
      _
    $region23: #{tpu_custom_call.1} parent=1 // pred_check_branch
      %24 = sbr.rel (0) target = $region25
    $region24: #{tpu_custom_call.1} parent=1 // pred_region
      _
    $region25: #{tpu_custom_call.1} parent=1 // pred_fallthru
      _
    // Predicated region
    $region26: #{tpu_custom_call.1} parent=1 // pred_check
      _
    $region27: #{tpu_custom_call.1} parent=1 // pred_check_branch
      %26 = sbr.rel (0) target = $region29
    $region28: #{tpu_custom_call.1} parent=1 // pred_region
      _
    $region29: #{tpu_custom_call.1} parent=1 // pred_fallthru
      _
    %v28 = vld [vmem:[%s0] sm:$0xff]
    %v29 = vpack.c.bf16 %v28, %v28
    %v30 = vld [vmem:[%s2] sm:$0x1]
    %v31 = vld [vmem:[%s4] sm:$0x1]
    %v32 = vld [vmem:[%s6] sm:$0x1]
    %v33 = vld [vmem:[%s1] sm:$0xf]
    %v35 = vlaneseq
    %v36 = vshrl.u32 %v35, 7
    %v37 = vsub.s32 0, %v36
    %v38 = vrot.slane %v30, %v37
    %vm40 = vcmask 56320
    %v42 = vsel %vm40, %v29, 0
    %vm44 = vcmask 1042432
    %vm45 = vcmask 1043456
    %v46 = vsel %vm44, 4294967295, 65535
    %v47 = vsel %vm45, %v46, 0
    %v49 = vand.u32 %v33, %v47
    %51 = vmatprep.subr.bf16.mxu0 0
    %52 = vmatpush1.bf16.msra.mxu0 0
    %53 = vmatprep.subr.bf16.mxu0 0
    %54 = vmatpush1.bf16.msra.mxu0 0
    %55 = vmatprep.subr.bf16.mxu0 0
    %56 = vmatpush1.bf16.msra.mxu0 0
    %57 = vmatprep.subr.bf16.mxu0 0
    %58 = vmatpush1.bf16.msra.mxu0 0
    %59 = vmatprep.subr.bf16.mxu0 0
    %60 = vmatpush1.bf16.msra.mxu0 0
    %61 = vmatprep.subr.bf16.mxu0 0
    %62 = vmatpush1.bf16.msra.mxu0 0
    %63 = vmatprep.subr.bf16.mxu0 0
    %64 = vmatpush1.bf16.msra.mxu0 0
    %65 = vmatprep.subr.bf16.mxu0 0
    %66 = vmatpush1.bf16.msra.mxu0 %v49
    %67 = vmatprep.subr.bf16.mxu0 0
    %68 = vmatpush2.bf16.msra.mxu0 0
    %69 = vmatprep.subr.bf16.mxu0 0
    %70 = vmatpush2.bf16.msra.mxu0 0
    %71 = vmatprep.subr.bf16.mxu0 0
    %72 = vmatpush2.bf16.msra.mxu0 0
    %73 = vmatprep.subr.bf16.mxu0 0
    %74 = vmatpush2.bf16.msra.mxu0 0
    %75 = vmatprep.subr.bf16.mxu0 0
    %76 = vmatpush2.bf16.msra.mxu0 0
    %77 = vmatprep.subr.bf16.mxu0 0
    %78 = vmatpush2.bf16.msra.mxu0 0
    %79 = vmatprep.subr.bf16.mxu0 0
    %80 = vmatpush2.bf16.msra.mxu0 0
    %81 = vmatprep.subr.bf16.mxu0 0
    %82 = vmatpush2.bf16.msra.mxu0 0
    %83 = vmatprep.mubr.bf16.mxu0 0
    %84 = vmatmul.mubr.bf16.gmra.mxu0 %v42
    %v85 = vpop.f32.mrf.mxu0
    %v86 = vadd.f32 %v38, %v85
    %v87 = vpop.f32.mrf.mxu0
    %v88 = vpop.f32.mrf.mxu0
    %v89 = vpop.f32.mrf.mxu0
    %90 = vdwg.mxu0
    %v91 = vmax.f32 %v86, 0.0
    %v92 = vpack.c.bf16 %v91, %v91
    %v93 = vld [vmem:[%s3] sm:$0xf]
    %v94 = vld [vmem:[%s3 + $0x4] sm:$0xf]
    %v95 = vld [vmem:[%s3 + $0x8] sm:$0xf]
    %v96 = vld [vmem:[%s3 + $0xc] sm:$0xf]
    %v97 = vld [vmem:[%s3 + $0x10] sm:$0xf]
    %v98 = vld [vmem:[%s3 + $0x14] sm:$0xf]
    %v99 = vld [vmem:[%s3 + $0x18] sm:$0xf]
    %v100 = vld [vmem:[%s3 + $0x1c] sm:$0xf]
    %v101 = vld [vmem:[%s3 + $0x20] sm:$0xf]
    %v102 = vld [vmem:[%s3 + $0x24] sm:$0xf]
    %v103 = vld [vmem:[%s3 + $0x28] sm:$0xf]
    %v104 = vld [vmem:[%s3 + $0x2c] sm:$0xf]
    %v105 = vld [vmem:[%s3 + $0x30] sm:$0xf]
    %v106 = vld [vmem:[%s3 + $0x34] sm:$0xf]
    %v107 = vld [vmem:[%s3 + $0x38] sm:$0xf]
    %v108 = vld [vmem:[%s3 + $0x3c] sm:$0xf]
    %v110 = vlaneseq
    %v111 = vshrl.u32 %v110, 7
    %v112 = vsub.s32 0, %v111
    %v113 = vrot.slane %v31, %v112
    %v131 = vunpack.c.l.b16 %v93
    %v132 = vunpack.c.l.b16 %v94
    %v133 = vunpack.c.l.b16 %v95
    %v134 = vunpack.c.l.b16 %v96
    %v135 = vunpack.c.l.b16 %v97
    %v136 = vunpack.c.l.b16 %v98
    %v137 = vunpack.c.l.b16 %v99
    %v138 = vunpack.c.l.b16 %v100
    %v139 = vunpack.c.l.b16 %v101
    %v140 = vunpack.c.l.b16 %v102
    %v141 = vunpack.c.l.b16 %v103
    %v142 = vunpack.c.l.b16 %v104
    %v143 = vunpack.c.l.b16 %v105
    %v144 = vunpack.c.l.b16 %v106
    %v145 = vunpack.c.l.b16 %v107
    %v146 = vunpack.c.l.b16 %v108
    %v147 = vpack.c.b16 %v132, %v131
    %v148 = vpack.c.b16 %v134, %v133
    %v149 = vpack.c.b16 %v136, %v135
    %v150 = vpack.c.b16 %v138, %v137
    %v151 = vpack.c.b16 %v140, %v139
    %v152 = vpack.c.b16 %v142, %v141
    %v153 = vpack.c.b16 %v144, %v143
    %v154 = vpack.c.b16 %v146, %v145
    %163 = vmatprep.subr.bf16.mxu0 0
    %164 = vmatpush1.bf16.msra.mxu0 %v154
    %165 = vmatprep.subr.bf16.mxu0 0
    %166 = vmatpush1.bf16.msra.mxu0 %v153
    %167 = vmatprep.subr.bf16.mxu0 0
    %168 = vmatpush1.bf16.msra.mxu0 %v152
    %169 = vmatprep.subr.bf16.mxu0 0
    %170 = vmatpush1.bf16.msra.mxu0 %v151
    %171 = vmatprep.subr.bf16.mxu0 0
    %172 = vmatpush1.bf16.msra.mxu0 %v150
    %173 = vmatprep.subr.bf16.mxu0 0
    %174 = vmatpush1.bf16.msra.mxu0 %v149
    %175 = vmatprep.subr.bf16.mxu0 0
    %176 = vmatpush1.bf16.msra.mxu0 %v148
    %177 = vmatprep.subr.bf16.mxu0 0
    %178 = vmatpush1.bf16.msra.mxu0 %v147
    %179 = vmatprep.subr.bf16.mxu0 0
    %180 = vmatpush2.bf16.msra.mxu0 0
    %181 = vmatprep.subr.bf16.mxu0 0
    %182 = vmatpush2.bf16.msra.mxu0 0
    %183 = vmatprep.subr.bf16.mxu0 0
    %184 = vmatpush2.bf16.msra.mxu0 0
    %185 = vmatprep.subr.bf16.mxu0 0
    %186 = vmatpush2.bf16.msra.mxu0 0
    %187 = vmatprep.subr.bf16.mxu0 0
    %188 = vmatpush2.bf16.msra.mxu0 0
    %189 = vmatprep.subr.bf16.mxu0 0
    %190 = vmatpush2.bf16.msra.mxu0 0
    %191 = vmatprep.subr.bf16.mxu0 0
    %192 = vmatpush2.bf16.msra.mxu0 0
    %193 = vmatprep.subr.bf16.mxu0 0
    %194 = vmatpush2.bf16.msra.mxu0 0
    %195 = vmatprep.mubr.bf16.mxu0 0
    %196 = vmatmul.mubr.bf16.gmra.mxu0 %v92
    %v197 = vpop.f32.mrf.mxu0
    %v198 = vadd.f32 %v113, %v197
    %v199 = vpop.f32.mrf.mxu0
    %v200 = vpop.f32.mrf.mxu0
    %v201 = vpop.f32.mrf.mxu0
    %202 = vdwg.mxu0
    %v203 = vmax.f32 %v198, 0.0
    %v204 = vpack.c.bf16 %v203, %v203
    %v205 = vld [vmem:[%s5] sm:$0xf]
    %v206 = vld [vmem:[%s5 + $0x4] sm:$0xf]
    %v207 = vld [vmem:[%s5 + $0x8] sm:$0xf]
    %v208 = vld [vmem:[%s5 + $0xc] sm:$0xf]
    %v209 = vld [vmem:[%s5 + $0x10] sm:$0xf]
    %v210 = vld [vmem:[%s5 + $0x14] sm:$0xf]
    %v211 = vld [vmem:[%s5 + $0x18] sm:$0xf]
    %v212 = vld [vmem:[%s5 + $0x1c] sm:$0xf]
    %v213 = vld [vmem:[%s5 + $0x20] sm:$0xf]
    %v214 = vld [vmem:[%s5 + $0x24] sm:$0xf]
    %v215 = vld [vmem:[%s5 + $0x28] sm:$0xf]
    %v216 = vld [vmem:[%s5 + $0x2c] sm:$0xf]
    %v217 = vld [vmem:[%s5 + $0x30] sm:$0xf]
    %v218 = vld [vmem:[%s5 + $0x34] sm:$0xf]
    %v219 = vld [vmem:[%s5 + $0x38] sm:$0xf]
    %v220 = vld [vmem:[%s5 + $0x3c] sm:$0xf]
    %v222 = vlaneseq
    %v223 = vshrl.u32 %v222, 7
    %v224 = vsub.s32 0, %v223
    %v225 = vrot.slane %v32, %v224
    %v243 = vunpack.c.l.b16 %v205
    %v244 = vunpack.c.l.b16 %v206
    %v245 = vunpack.c.l.b16 %v207
    %v246 = vunpack.c.l.b16 %v208
    %v247 = vunpack.c.l.b16 %v209
    %v248 = vunpack.c.l.b16 %v210
    %v249 = vunpack.c.l.b16 %v211
    %v250 = vunpack.c.l.b16 %v212
    %v251 = vunpack.c.l.b16 %v213
    %v252 = vunpack.c.l.b16 %v214
    %v253 = vunpack.c.l.b16 %v215
    %v254 = vunpack.c.l.b16 %v216
    %v255 = vunpack.c.l.b16 %v217
    %v256 = vunpack.c.l.b16 %v218
    %v257 = vunpack.c.l.b16 %v219
    %v258 = vunpack.c.l.b16 %v220
    %v259 = vpack.c.b16 %v244, %v243
    %v260 = vpack.c.b16 %v246, %v245
    %v261 = vpack.c.b16 %v248, %v247
    %v262 = vpack.c.b16 %v250, %v249
    %v263 = vpack.c.b16 %v252, %v251
    %v264 = vpack.c.b16 %v254, %v253
    %v265 = vpack.c.b16 %v256, %v255
    %v266 = vpack.c.b16 %v258, %v257
    %275 = vmatprep.subr.bf16.mxu0 0
    %276 = vmatpush1.bf16.msra.mxu0 %v266
    %277 = vmatprep.subr.bf16.mxu0 0
    %278 = vmatpush1.bf16.msra.mxu0 %v265
    %279 = vmatprep.subr.bf16.mxu0 0
    %280 = vmatpush1.bf16.msra.mxu0 %v264
    %281 = vmatprep.subr.bf16.mxu0 0
    %282 = vmatpush1.bf16.msra.mxu0 %v263
    %283 = vmatprep.subr.bf16.mxu0 0
    %284 = vmatpush1.bf16.msra.mxu0 %v262
    %285 = vmatprep.subr.bf16.mxu0 0
    %286 = vmatpush1.bf16.msra.mxu0 %v261
    %287 = vmatprep.subr.bf16.mxu0 0
    %288 = vmatpush1.bf16.msra.mxu0 %v260
    %289 = vmatprep.subr.bf16.mxu0 0
    %290 = vmatpush1.bf16.msra.mxu0 %v259
    %291 = vmatprep.subr.bf16.mxu0 0
    %292 = vmatpush2.bf16.msra.mxu0 0
    %293 = vmatprep.subr.bf16.mxu0 0
    %294 = vmatpush2.bf16.msra.mxu0 0
    %295 = vmatprep.subr.bf16.mxu0 0
    %296 = vmatpush2.bf16.msra.mxu0 0
    %297 = vmatprep.subr.bf16.mxu0 0
    %298 = vmatpush2.bf16.msra.mxu0 0
    %299 = vmatprep.subr.bf16.mxu0 0
    %300 = vmatpush2.bf16.msra.mxu0 0
    %301 = vmatprep.subr.bf16.mxu0 0
    %302 = vmatpush2.bf16.msra.mxu0 0
    %303 = vmatprep.subr.bf16.mxu0 0
    %304 = vmatpush2.bf16.msra.mxu0 0
    %305 = vmatprep.subr.bf16.mxu0 0
    %306 = vmatpush2.bf16.msra.mxu0 0
    %307 = vmatprep.mubr.bf16.mxu0 0
    %308 = vmatmul.mubr.bf16.gmra.mxu0 %v204
    %v309 = vpop.f32.mrf.mxu0
    %v310 = vadd.f32 %v225, %v309
    %v311 = vpop.f32.mrf.mxu0
    %v312 = vpop.f32.mrf.mxu0
    %v313 = vpop.f32.mrf.mxu0
    %314 = vdwg.mxu0
    %vm315 = vcmask 179200
    %316 = vst.msk [vmem:[#allocation2] sm:$0xff] %vm315, %v310
    // Predicated region
    $region30: #{tpu_custom_call.1} parent=1 // pred_check
      _
    $region31: #{tpu_custom_call.1} parent=1 // pred_check_branch
      %318 = sbr.rel (0) target = $region33
    $region32: #{tpu_custom_call.1} parent=1 // pred_region
      %s320 = ssub.s32 128, 128
      %321 = vsyncadd [#allocation3], %s320
      %s323 = sshll.u32 [#allocation2], 4
      %s324 = int_to_ptr.vmem [resolvable:$true] %s323
      %326 = dma.vmem_to_hbm [thread:$0]  %s324, 128, %s7, [#allocation3]
    $region33: #{tpu_custom_call.1} parent=1 // pred_fallthru
      _
    // Predicated region
    $region34: #{tpu_custom_call.1} parent=1 // pred_check
      _
    $region35: #{tpu_custom_call.1} parent=1 // pred_check_branch
      %328 = sbr.rel (0) target = $region37
    $region36: #{tpu_custom_call.1} parent=1 // pred_region
      %329 = dma.done [#allocation3], 128
    $region37: #{tpu_custom_call.1} parent=1 // pred_fallthru
      _
    %330 = vsyncpa [#allocation3], 1

</llo_original>
